<compile_context>
chip_gen: v6e
topology: v6e:2x2x1
jax: 0.10.0
libtpu: 0.0.40
codegen_flags: <defaults>
</compile_context>

<pallas_src>
import functools
import math
from typing import NamedTuple

import jax
import jax.numpy as jnp
from jax import lax
from jax.experimental import pallas as pl
from jax.experimental.pallas import tpu as pltpu


def _round_up(x: int, m: int) -> int:
    return (x + m - 1) // m * m


def _tpu_vmem_capacity_bytes() -> int:
    """Physical VMEM per TensorCore; falls back to 128 MiB if unavailable."""
    try:
        info = pltpu.get_tpu_info()
        cap = int(getattr(info, "vmem_capacity_bytes", 0))
        if cap > 0:
            return cap
    except Exception:
        pass
    return 128 * 1024 * 1024


def _block_spec(block_shape, index_map, buffer_count=None):
    """BlockSpec with optional pipelining depth; falls back gracefully if the
    pipeline_mode kwarg is unavailable in the installed JAX version."""
    if buffer_count is not None and hasattr(pl, "Buffered"):
        try:
            return pl.BlockSpec(block_shape, index_map,
                                pipeline_mode=pl.Buffered(buffer_count))
        except TypeError:
            pass
    return pl.BlockSpec(block_shape, index_map)


def _gelu(h, approximate: bool):
    if approximate:
        # tanh-approx GELU -> transcendental goes to the (otherwise idle) EUP slot.
        c = jnp.float32(math.sqrt(2.0 / math.pi))
        return 0.5 * h * (1.0 + jnp.tanh(c * (h + 0.044715 * h * h * h)))
    # exact GELU (erf), matching PyTorch nn.GELU() default.
    return 0.5 * h * (1.0 + lax.erf(h * jnp.float32(1.0 / math.sqrt(2.0))))


# ----------------------------------------------------------------------------- kernels

def _mlp_kernel_resident(x_ref, w1_ref, b1_ref, w2_ref, b2_ref, o_ref, *,
                         approximate_gelu: bool):
    # x_ref: (tm, Dp)  w1_ref: (Dp, Hp)  b1_ref: (1, Hp)  w2_ref: (Hp, Dp)
    # b2_ref: (1, Dp)  o_ref: (tm, Dp).  Whole hidden dim resident -> no scratch.
    x = x_ref[...].astype(w1_ref.dtype)                      # cast on-chip (VPU)
    h = jnp.dot(x, w1_ref[...], preferred_element_type=jnp.float32) + b1_ref[...]
    h = _gelu(h, approximate_gelu)
    out = jnp.dot(h.astype(w2_ref.dtype), w2_ref[...],
                  preferred_element_type=jnp.float32)
    o_ref[...] = (out + b2_ref[...]).astype(o_ref.dtype)


def _mlp_kernel_streaming(x_ref, w1_ref, b1_ref, w2_ref, b2_ref, o_ref, acc_ref, *,
                          approximate_gelu: bool):
    # Streams hidden-dim chunks (grid axis 1, "arbitrary") and accumulates lin2
    # partial products into a (tm, Dp) f32 scratch; b2 added exactly once.
    j = pl.program_id(1)

    @pl.when(j == 0)
    def _init():
        acc_ref[...] = jnp.zeros_like(acc_ref)

    x = x_ref[...].astype(w1_ref.dtype)
    h = jnp.dot(x, w1_ref[...], preferred_element_type=jnp.float32) + b1_ref[...]
    h = _gelu(h, approximate_gelu)
    acc_ref[...] += jnp.dot(h.astype(w2_ref.dtype), w2_ref[...],
                            preferred_element_type=jnp.float32)

    @pl.when(j == pl.num_programs(1) - 1)
    def _finalize():
        o_ref[...] = (acc_ref[...] + b2_ref[...]).astype(o_ref.dtype)


# --------------------------------------------------------------------------- parameters

class MLPParams(NamedTuple):
    w1: jax.Array     # (Dp, Hp), matmul dtype, zero-padded
    b1: jax.Array     # (1, Hp), f32
    w2: jax.Array     # (Hp, Dp), matmul dtype, zero-padded
    b2: jax.Array     # (1, Dp), f32
    d: int            # logical embedding dim
    h: int            # logical hidden dim
    th: int           # hidden chunk size (== Hp when resident)
    resident: bool    # weights fully resident in VMEM


def prepare_mlp_params(w1, b1, w2, b2, *, matmul_dtype=jnp.bfloat16,
                       resident_weight_budget=None) -> MLPParams:
    """Pad/cast MLP weights ONCE (out of the hot path).

    w1: (D, H), b1: (H,), w2: (H, D), b2: (D,)  (in_features, out_features layout).
    Default matmul_dtype is bf16 (3-6x MXU throughput, half the weight DMA bytes);
    accumulation stays f32 inside the kernel.
    """
    D, H = w1.shape
    assert w2.shape == (H, D) and b1.shape == (H,) and b2.shape == (D,)
    matmul_dtype = jnp.dtype(matmul_dtype)
    itemsize = matmul_dtype.itemsize

    vmem_cap = _tpu_vmem_capacity_bytes()
    if resident_weight_budget is None:
        # Single-buffered residency budget sized per generation (~25 MiB on v7x,
        # ~51 MiB on v5e/v6e).
        resident_weight_budget = int(0.40 * vmem_cap)

    Dp = _round_up(D, 128)
    Hp = _round_up(H, 128)
    resident = 2 * Dp * Hp * itemsize <= resident_weight_budget
    if resident:
        th = Hp
    else:
        # Streaming: keep chunks >= 512 to feed the MXU K-dim and amortize the
        # acc read-modify-write / per-grid-step overhead. Zero-padding H is free.
        Hp = _round_up(H, 512)
        th = 1024 if (Hp % 1024 == 0 and Hp >= 2048) else 512

    def _pad_cast(a, shape):
        if a.shape == shape and a.dtype == matmul_dtype:
            return a
        return jnp.zeros(shape, matmul_dtype).at[:a.shape[0], :a.shape[1]].set(
            a.astype(matmul_dtype))

    w1p = _pad_cast(w1, (Dp, Hp))
    w2p = _pad_cast(w2, (Hp, Dp))
    b1p = jnp.zeros((1, Hp), jnp.float32).at[0, :H].set(b1.astype(jnp.float32))
    b2p = jnp.zeros((1, Dp), jnp.float32).at[0, :D].set(b2.astype(jnp.float32))
    return MLPParams(w1p, b1p, w2p, b2p, D, H, th, resident)


# ------------------------------------------------------------------------------ wrapper

def mlp_block(x, params: MLPParams, *, approximate_gelu=None, row_block=None):
    """x: (..., D) -> (..., D), matching MLPBlock.forward semantics.

    Note: with bf16 (default) or f32 matmul dtype the MXU runs a bf16-based pipeline,
    so results are close to but not bit-exact vs a full-f32 reference.
    """
    D, H = params.d, params.h
    Dp, Hp = params.w1.shape
    th = params.th
    resident = params.resident
    w_dtype = params.w1.dtype
    w_itemsize = jnp.dtype(w_dtype).itemsize
    out_dtype = x.dtype
    x_itemsize = jnp.dtype(x.dtype).itemsize
    out_itemsize = jnp.dtype(out_dtype).itemsize

    if approximate_gelu is None:
        # On the bf16 path the erf/tanh difference is below bf16 noise -> use the
        # EUP-routed tanh approximation; keep exact erf for the f32 path.
        approximate_gelu = (w_dtype == jnp.bfloat16)

    orig_shape = x.shape
    assert orig_shape[-1] == D
    x2d = x.reshape(-1, D)
    M = x2d.shape[0]

    # Row tile: align to the sublane packing of the matmul dtype; bigger rows when
    # streaming so the streamed weights stay MXU-bound (v6e roofline).
    align_m = {1: 32, 2: 16}.get(w_itemsize, 8)
    if row_block is None:
        row_block = 256 if resident else 512
    tm = min(_round_up(row_block, align_m), _round_up(M, align_m))
    # Keep n_m >= 2 so the "parallel" row axis feeds both v7x TensorCores.
    if M >= 2 * align_m and _round_up(M, tm) // tm < 2:
        tm = _round_up(-(-M // 2), align_m)
    Mp = _round_up(M, tm)
    n_m = Mp // tm
    n_h = Hp // th

    # Pad x only when needed (zero padding keeps the valid region exact).
    if x2d.shape == (Mp, Dp):
        xp = x2d
    else:
        xp = jnp.zeros((Mp, Dp), x2d.dtype).at[:M, :D].set(x2d)

    # Scoped VMEM: size from tiles with headroom, capped per generation (<= ~85% of
    # physical VMEM; v7x has only 64 MiB per TensorCore).
    vmem_cap = _tpu_vmem_capacity_bytes()
    weight_buf = 1 if resident else 2
    vmem_est = (2 * tm * Dp * x_itemsize                     # x tile (double-buffered)
                + 2 * tm * Dp * out_itemsize                 # out tile
                + weight_buf * (Dp * th + th * Dp) * w_itemsize
                + weight_buf * (th + Dp) * 4                 # biases (f32)
                + tm * th * 4                                # f32 hidden intermediate
                + tm * Dp * 4)                               # f32 accumulator / staging
    vmem_limit = min(max(int(vmem_est * 1.5), 32 * 1024 * 1024),
                     int(0.85 * vmem_cap))

    weight_stream_factor = 1 if resident else n_m
    cost = pl.CostEstimate(
        flops=4 * Mp * Dp * Hp,
        transcendentals=Mp * Hp,
        bytes_accessed=(Mp * Dp * x_itemsize
                        + weight_stream_factor * 2 * Dp * Hp * w_itemsize
                        + (Hp + Dp) * 4
                        + Mp * Dp * out_itemsize),
    )

    if resident:
        # Weight block indices are constant over the grid -> single-buffer them
        # (double-buffering would only double VMEM residency with no benefit).
        grid_spec = pltpu.PrefetchScalarGridSpec(
            num_scalar_prefetch=0,
            grid=(n_m,),
            in_specs=[
                pl.BlockSpec((tm, Dp), lambda i: (i, 0)),                 # x rows
                _block_spec((Dp, Hp), lambda i: (0, 0), buffer_count=1),  # w1
                _block_spec((1, Hp), lambda i: (0, 0), buffer_count=1),   # b1
                _block_spec((Hp, Dp), lambda i: (0, 0), buffer_count=1),  # w2
                _block_spec((1, Dp), lambda i: (0, 0), buffer_count=1),   # b2
            ],
            out_specs=pl.BlockSpec((tm, Dp), lambda i: (i, 0)),
        )
        kernel = functools.partial(_mlp_kernel_resident,
                                   approximate_gelu=approximate_gelu)
        dims = ("parallel",)
    else:
        grid_spec = pltpu.PrefetchScalarGridSpec(
            num_scalar_prefetch=0,
            grid=(n_m, n_h),
            in_specs=[
                pl.BlockSpec((tm, Dp), lambda i, j: (i, 0)),              # x rows
                pl.BlockSpec((Dp, th), lambda i, j: (0, j)),              # w1 chunk
                pl.BlockSpec((1, th), lambda i, j: (0, j)),               # b1 chunk
                pl.BlockSpec((th, Dp), lambda i, j: (j, 0)),              # w2 chunk
                _block_spec((1, Dp), lambda i, j: (0, 0), buffer_count=1),  # b2
            ],
            out_specs=pl.BlockSpec((tm, Dp), lambda i, j: (i, 0)),
            scratch_shapes=[pltpu.VMEM((tm, Dp), jnp.float32)],
        )
        kernel = functools.partial(_mlp_kernel_streaming,
                                   approximate_gelu=approximate_gelu)
        dims = ("parallel", "arbitrary")

    out = pl.pallas_call(
        kernel,
        out_shape=jax.ShapeDtypeStruct((Mp, Dp), out_dtype),
        grid_spec=grid_spec,
        compiler_params=pltpu.CompilerParams(
            dimension_semantics=dims,
            vmem_limit_bytes=vmem_limit,
        ),
        cost_estimate=cost,
    )(xp, params.w1, params.b1, params.w2, params.b2)

    if (Mp, Dp) != (M, D):
        out = out[:M, :D]
    return out.reshape(orig_shape)


# ---------------------------------------------------------------------------- reference

def _reference(x2d, w1, b1, w2, b2):
    h = x2d @ w1 + b1
    h = 0.5 * h * (1.0 + lax.erf(h / jnp.float32(math.sqrt(2.0))))
    return h @ w2 + b2


if __name__ == "__main__":
    # Shapes implied by Block.forward: x is (B, H, W, dim); MLP hidden = dim * mlp_ratio.
    batch, hh, ww = 2, 8, 8
    dim = 32
    mlp_dim = int(dim * 4.0)  # mlp_ratio = 4.0

    key = jax.random.PRNGKey(0)
    kx, k1, k2, k3, k4 = jax.random.split(key, 5)

    x = jax.random.normal(kx, (batch, hh, ww, dim), dtype=jnp.float32)

    # nn.Linear-like uniform init, stored as (in_features, out_features).
    bound1 = 1.0 / math.sqrt(dim)
    w1 = jax.random.uniform(k1, (dim, mlp_dim), jnp.float32, -bound1, bound1)
    b1 = jax.random.uniform(k2, (mlp_dim,), jnp.float32, -bound1, bound1)
    bound2 = 1.0 / math.sqrt(mlp_dim)
    w2 = jax.random.uniform(k3, (mlp_dim, dim), jnp.float32, -bound2, bound2)
    b2 = jax.random.uniform(k4, (dim,), jnp.float32, -bound2, bound2)

    ref = _reference(x.reshape(-1, dim), w1, b1, w2, b2).reshape(x.shape)

    # 1) Default fast path: bf16 MXU, resident single-buffered weights, tanh GELU.
    params_bf16 = prepare_mlp_params(w1, b1, w2, b2)
    out_bf16 = jax.block_until_ready(mlp_block(x, params_bf16))
    assert out_bf16.shape == x.shape
    assert jnp.allclose(out_bf16, ref, atol=5e-2, rtol=5e-2), "bf16 kernel mismatch"

    # 2) f32 path with exact erf GELU (module's nn.GELU default semantics).
    params_f32 = prepare_mlp_params(w1, b1, w2, b2, matmul_dtype=jnp.float32)
    out_f32 = jax.block_until_ready(mlp_block(x, params_f32, approximate_gelu=False))
    assert jnp.allclose(out_f32, ref, atol=1e-4, rtol=1e-4), "f32 kernel mismatch"

    # 3) Streaming (H-chunked, f32 accumulator) path, forced via a zero residency budget.
    mlp_dim_big = 1024
    w1b = jax.random.uniform(k1, (dim, mlp_dim_big), jnp.float32, -bound1, bound1)
    b1b = jax.random.uniform(k2, (mlp_dim_big,), jnp.float32, -bound1, bound1)
    bound2b = 1.0 / math.sqrt(mlp_dim_big)
    w2b = jax.random.uniform(k3, (mlp_dim_big, dim), jnp.float32, -bound2b, bound2b)
    b2b = jax.random.uniform(k4, (dim,), jnp.float32, -bound2b, bound2b)
    refb = _reference(x.reshape(-1, dim), w1b, b1b, w2b, b2b).reshape(x.shape)

    params_stream = prepare_mlp_params(w1b, b1b, w2b, b2b, resident_weight_budget=0)
    assert not params_stream.resident
    out_stream = jax.block_until_ready(mlp_block(x, params_stream))
    assert jnp.allclose(out_stream, refb, atol=5e-2, rtol=5e-2), "streaming kernel mismatch"

    print("KERNEL_OK")
</pallas_src>

<mosaic_0001>
module attributes {stable_mosaic.version = 11 : i64} {
  func.func @_mlp_kernel_resident(%arg0: i32, %arg1: memref<64x128xf32, #tpu.memory_space<vmem>>, %arg2: memref<128x128xbf16, #tpu.memory_space<vmem>>, %arg3: memref<1x128xf32, #tpu.memory_space<vmem>>, %arg4: memref<128x128xbf16, #tpu.memory_space<vmem>>, %arg5: memref<1x128xf32, #tpu.memory_space<vmem>>, %arg6: memref<64x128xf32, #tpu.memory_space<vmem>>) attributes {dimension_semantics = [#tpu.dimension_semantics<parallel>], iteration_bounds = array<i64: 2>, scalar_prefetch = 0 : i64, scratch_operands = 0 : i64, tpu.core_type = #tpu.core_type<tc>, window_params = [{transform_indices = @transform_0, window_bounds = array<i64: 64, 128>}, {pipeline_mode = #tpu.pipeline_mode<synchronous>, transform_indices = @transform_1, window_bounds = array<i64: 128, 128>}, {pipeline_mode = #tpu.pipeline_mode<synchronous>, transform_indices = @transform_2, window_bounds = array<i64: 1, 128>}, {pipeline_mode = #tpu.pipeline_mode<synchronous>, transform_indices = @transform_3, window_bounds = array<i64: 128, 128>}, {pipeline_mode = #tpu.pipeline_mode<synchronous>, transform_indices = @transform_4, window_bounds = array<i64: 1, 128>}, {transform_indices = @transform_5, window_bounds = array<i64: 64, 128>}]} {
    %c0 = arith.constant 0 : index
    %c0_0 = arith.constant 0 : index
    %0 = vector.load %arg1[%c0, %c0_0] : memref<64x128xf32, #tpu.memory_space<vmem>>, vector<64x128xf32>
    %1 = arith.truncf %0 : vector<64x128xf32> to vector<64x128xbf16>
    %c0_1 = arith.constant 0 : index
    %c0_2 = arith.constant 0 : index
    %2 = vector.load %arg2[%c0_1, %c0_2] : memref<128x128xbf16, #tpu.memory_space<vmem>>, vector<128x128xbf16>
    %cst = arith.constant dense<0.000000e+00> : vector<64x128xf32>
    %3 = tpu.matmul %1, %2, %cst {dimension_numbers = #tpu.dot_dimension_numbers<[1], [0], [0], [1], [0, 0, 1, 1], [], []>} : vector<64x128xbf16>, vector<128x128xbf16>, vector<64x128xf32> -> vector<64x128xf32>
    %c0_3 = arith.constant 0 : index
    %c0_4 = arith.constant 0 : index
    %4 = vector.load %arg3[%c0_3, %c0_4] : memref<1x128xf32, #tpu.memory_space<vmem>>, vector<1x128xf32>
    %5 = vector.broadcast %4 : vector<1x128xf32> to vector<64x128xf32>
    %6 = arith.addf %3, %5 : vector<64x128xf32>
    %cst_5 = arith.constant 5.000000e-01 : f32
    %7 = vector.broadcast %cst_5 : f32 to vector<64x128xf32>
    %8 = arith.mulf %7, %6 : vector<64x128xf32>
    %cst_6 = arith.constant 4.471500e-02 : f32
    %9 = vector.broadcast %cst_6 : f32 to vector<64x128xf32>
    %10 = arith.mulf %9, %6 : vector<64x128xf32>
    %11 = arith.mulf %10, %6 : vector<64x128xf32>
    %12 = arith.mulf %11, %6 : vector<64x128xf32>
    %13 = arith.addf %6, %12 : vector<64x128xf32>
    %cst_7 = arith.constant 0.797884583 : f32
    %14 = vector.broadcast %cst_7 : f32 to vector<64x128xf32>
    %15 = arith.mulf %14, %13 : vector<64x128xf32>
    %16 = math.tanh %15 : vector<64x128xf32>
    %cst_8 = arith.constant 1.000000e+00 : f32
    %17 = vector.broadcast %cst_8 : f32 to vector<64x128xf32>
    %18 = arith.addf %17, %16 : vector<64x128xf32>
    %19 = arith.mulf %8, %18 : vector<64x128xf32>
    %20 = arith.truncf %19 : vector<64x128xf32> to vector<64x128xbf16>
    %c0_9 = arith.constant 0 : index
    %c0_10 = arith.constant 0 : index
    %21 = vector.load %arg4[%c0_9, %c0_10] : memref<128x128xbf16, #tpu.memory_space<vmem>>, vector<128x128xbf16>
    %cst_11 = arith.constant dense<0.000000e+00> : vector<64x128xf32>
    %22 = tpu.matmul %20, %21, %cst_11 {dimension_numbers = #tpu.dot_dimension_numbers<[1], [0], [0], [1], [0, 0, 1, 1], [], []>} : vector<64x128xbf16>, vector<128x128xbf16>, vector<64x128xf32> -> vector<64x128xf32>
    %c0_12 = arith.constant 0 : index
    %c0_13 = arith.constant 0 : index
    %23 = vector.load %arg5[%c0_12, %c0_13] : memref<1x128xf32, #tpu.memory_space<vmem>>, vector<1x128xf32>
    %24 = vector.broadcast %23 : vector<1x128xf32> to vector<64x128xf32>
    %25 = arith.addf %22, %24 : vector<64x128xf32>
    %c0_14 = arith.constant 0 : index
    %c0_15 = arith.constant 0 : index
    %26 = vector.load %arg6[%c0_14, %c0_15] : memref<64x128xf32, #tpu.memory_space<vmem>>, vector<64x128xf32>
    tpu.vector_store %arg6[%c0_14, %c0_15], %25 {strides = array<i32>} : memref<64x128xf32, #tpu.memory_space<vmem>>, vector<64x128xf32>,
    return
  }
  func.func @transform_0(%arg0: i32) -> (i32, i32) {
    %c0_i32 = arith.constant 0 : i32
    %c0_i32_0 = arith.constant 0 : i32
    return %arg0, %c0_i32 : i32, i32
  }
  func.func @transform_1(%arg0: i32) -> (i32, i32) {
    %c0_i32 = arith.constant 0 : i32
    %c0_i32_0 = arith.constant 0 : i32
    %c0_i32_1 = arith.constant 0 : i32
    return %c0_i32, %c0_i32_0 : i32, i32
  }
  func.func @transform_2(%arg0: i32) -> (i32, i32) {
    %c0_i32 = arith.constant 0 : i32
    %c0_i32_0 = arith.constant 0 : i32
    %c0_i32_1 = arith.constant 0 : i32
    return %c0_i32, %c0_i32_0 : i32, i32
  }
  func.func @transform_3(%arg0: i32) -> (i32, i32) {
    %c0_i32 = arith.constant 0 : i32
    %c0_i32_0 = arith.constant 0 : i32
    %c0_i32_1 = arith.constant 0 : i32
    return %c0_i32, %c0_i32_0 : i32, i32
  }
  func.func @transform_4(%arg0: i32) -> (i32, i32) {
    %c0_i32 = arith.constant 0 : i32
    %c0_i32_0 = arith.constant 0 : i32
    %c0_i32_1 = arith.constant 0 : i32
    return %c0_i32, %c0_i32_0 : i32, i32
  }
  func.func @transform_5(%arg0: i32) -> (i32, i32) {
    %c0_i32 = arith.constant 0 : i32
    %c0_i32_0 = arith.constant 0 : i32
    return %arg0, %c0_i32 : i32, i32
  }
}

</mosaic_0001>

<llo_original>
// kernel: tpu_custom_call.1
$region0: #{tpu_custom_call.1}
  #allocation0 [shape = 'u32[]', space=smem, size = 0x4, offset = 0x4, fixed_abs, tag = 'smem constant byte address 0x4 - core index']
  #allocation1 [shape = 'u32[144,128]{1,0:T(1,128)}', space=vmem, size = 0x12000, scoped, tag = 'internal scratch']
  %s0 = inlined_call_operand.hbm [shape: f32[128,128], index: 0, kind: input, shape index: {}]
  %s1 = inlined_call_operand.hbm [shape: bf16[128,128], index: 1, kind: input, shape index: {}]
  %s2 = inlined_call_operand.vmem [shape: f32[1,128], index: 2, kind: input, shape index: {}]
  %s3 = inlined_call_operand.hbm [shape: bf16[128,128], index: 3, kind: input, shape index: {}]
  %s4 = inlined_call_operand.vmem [shape: f32[1,128], index: 4, kind: input, shape index: {}]
  %s5 = inlined_call_operand.hbm [shape: f32[128,128], index: 5, kind: output, shape index: {}]
  %s6 = sld [smem:[#allocation0]]
  $region65: #{tpu_custom_call.1} parent=0
    _
  %s8 = ssub.s32 1, %s6
  %s9 = scalar_select 0, %s8, %s6
  $region1: #{tpu_custom_call.1} parent=0
    #allocation2 [shape = 'u8[65536]{0}', space=vmem, size = 0x10000, scoped, tag = 'input window, operand 0']
    #allocation3 [shape = 's32[2]{0}', space=sflag, size = 0x8, scoped, tag = 'scoped memory for tpu_custom_call.1']
    #allocation4 [shape = 's32[2]{0}', space=sflag, size = 0x8, scoped, tag = 'scoped memory for tpu_custom_call.1']
    #allocation5 [shape = 'u8[32768]{0}', space=vmem, size = 0x8000, scoped, tag = 'input window, operand 1, single buffered']
    #allocation6 [shape = 's32[1]{0}', space=sflag, size = 0x4, scoped, tag = 'scoped memory for tpu_custom_call.1']
    #allocation7 [shape = 'u8[32768]{0}', space=vmem, size = 0x8000, scoped, tag = 'input window, operand 3, single buffered']
    #allocation8 [shape = 'u8[65536]{0}', space=vmem, size = 0x10000, scoped, tag = 'output window, operand 0']
    %10 = vsyncpa [#allocation3], 0
    %s11 = scalar_lea.sflag [#allocation3], 1
    %12 = vsyncpa %s11, 0
    %13 = vsyncpa [#allocation6], 0
    %14 = vsyncpa [#allocation4], 0
    %s15 = scalar_lea.sflag [#allocation4], 1
    %16 = vsyncpa %s15, 0
    loop: start=0, step=1, limit=4
    $region2: #{tpu_custom_call.1} parent=1 // loop_pre_header
      _
    $region3: #{tpu_custom_call.1} parent=1 // loop_header
      %s18 = sphi 0, %s22
      %p19 = scmp.ge.s32.totalorder %s18, 4
      %s28 = sphi 0, %s30
      %s31 = sphi 0, %s28
      %s32 = sphi 0, %s31
      %s48 = sphi 0, %s32
      %s52 = sphi 0, %s52
      %s54 = sphi 0, %s52
      %s55 = sphi 0, %s54
      %s69 = sphi 0, %s55
      %s73 = sphi 0, %s73
      %s75 = sphi 0, %s73
      %s76 = sphi 0, %s75
      %s90 = sphi 0, %s76
      %s94 = sphi 0, %s94
      %s96 = sphi 0, %s94
      %s97 = sphi 0, %s96
      %s111 = sphi 0, %s97
      %s115 = sphi 0, %s115
      %s117 = sphi 0, %s115
      %s118 = sphi 0, %s117
      %s132 = sphi 0, %s118
      %s138 = sphi 0, %s140
      %s141 = sphi 0, %s138
      %s142 = sphi 0, %s141
      %s158 = sphi 0, %s142
    $region4: #{tpu_custom_call.1} parent=1 // loop_header_branch
      %21 = sbr.rel (%p19) target = $region8
    $region5: #{tpu_custom_call.1} parent=1 // loop_body
      %s23 = ssub.s32 %s18, 1
      %s24 = ssub.s32 %s18, 2
      %s25 = sadd.s32 %s18, 1
      %s26 = ssub.s32 %s18, %s25
      %p27 = scmp.eq.s32.totalorder %s26, 0
      %s29 = sadd.s32 %s28, 1
      %s30 = scalar_select %p27, %s28, %s29
      %p33 = pneg %p27
      %p34 = scmp.eq.s32.totalorder %s18, 1
      %p35 = por %p33, %p34
      %p36 = scmp.ne.s32.totalorder %s28, %s31
      %p37 = scmp.eq.s32.totalorder %s18, 0
      %p38 = por %p36, %p37
      %p39 = scmp.ne.s32.totalorder %s28, %s31
      %p40 = scmp.eq.s32.totalorder %s23, 1
      %p41 = por %p39, %p40
      %p42 = scmp.ne.s32.totalorder %s31, %s32
      %p43 = scmp.eq.s32.totalorder %s23, 0
      %p44 = por %p42, %p43
      %p45 = scmp.ne.s32.totalorder %s31, %s32
      %p46 = scmp.eq.s32.totalorder %s24, 1
      %p47 = por %p45, %p46
      %p49 = scmp.ne.s32.totalorder %s32, %s48
      %p50 = scmp.eq.s32.totalorder %s24, 0
      %p51 = por %p49, %p50
      %s53 = sadd.s32 %s52, 1
      %p56 = scmp.eq.s32.totalorder %s18, 1
      %p57 = scmp.ne.s32.totalorder %s52, %s54
      %p58 = scmp.eq.s32.totalorder %s18, 0
      %p59 = por %p57, %p58
      %p60 = scmp.ne.s32.totalorder %s52, %s54
      %p61 = scmp.eq.s32.totalorder %s23, 1
      %p62 = por %p60, %p61
      %p63 = scmp.ne.s32.totalorder %s54, %s55
      %p64 = scmp.eq.s32.totalorder %s23, 0
      %p65 = por %p63, %p64
      %p66 = scmp.ne.s32.totalorder %s54, %s55
      %p67 = scmp.eq.s32.totalorder %s24, 1
      %p68 = por %p66, %p67
      %p70 = scmp.ne.s32.totalorder %s55, %s69
      %p71 = scmp.eq.s32.totalorder %s24, 0
      %p72 = por %p70, %p71
      %s74 = sadd.s32 %s73, 1
      %p77 = scmp.eq.s32.totalorder %s18, 1
      %p78 = scmp.ne.s32.totalorder %s73, %s75
      %p79 = scmp.eq.s32.totalorder %s18, 0
      %p80 = por %p78, %p79
      %p81 = scmp.ne.s32.totalorder %s73, %s75
      %p82 = scmp.eq.s32.totalorder %s23, 1
      %p83 = por %p81, %p82
      %p84 = scmp.ne.s32.totalorder %s75, %s76
      %p85 = scmp.eq.s32.totalorder %s23, 0
      %p86 = por %p84, %p85
      %p87 = scmp.ne.s32.totalorder %s75, %s76
      %p88 = scmp.eq.s32.totalorder %s24, 1
      %p89 = por %p87, %p88
      %p91 = scmp.ne.s32.totalorder %s76, %s90
      %p92 = scmp.eq.s32.totalorder %s24, 0
      %p93 = por %p91, %p92
      %s95 = sadd.s32 %s94, 1
      %p98 = scmp.eq.s32.totalorder %s18, 1
      %p99 = scmp.ne.s32.totalorder %s94, %s96
      %p100 = scmp.eq.s32.totalorder %s18, 0
      %p101 = por %p99, %p100
      %p102 = scmp.ne.s32.totalorder %s94, %s96
      %p103 = scmp.eq.s32.totalorder %s23, 1
      %p104 = por %p102, %p103
      %p105 = scmp.ne.s32.totalorder %s96, %s97
      %p106 = scmp.eq.s32.totalorder %s23, 0
      %p107 = por %p105, %p106
      %p108 = scmp.ne.s32.totalorder %s96, %s97
      %p109 = scmp.eq.s32.totalorder %s24, 1
      %p110 = por %p108, %p109
      %p112 = scmp.ne.s32.totalorder %s97, %s111
      %p113 = scmp.eq.s32.totalorder %s24, 0
      %p114 = por %p112, %p113
      %s116 = sadd.s32 %s115, 1
      %p119 = scmp.eq.s32.totalorder %s18, 1
      %p120 = scmp.ne.s32.totalorder %s115, %s117
      %p121 = scmp.eq.s32.totalorder %s18, 0
      %p122 = por %p120, %p121
      %p123 = scmp.ne.s32.totalorder %s115, %s117
      %p124 = scmp.eq.s32.totalorder %s23, 1
      %p125 = por %p123, %p124
      %p126 = scmp.ne.s32.totalorder %s117, %s118
      %p127 = scmp.eq.s32.totalorder %s23, 0
      %p128 = por %p126, %p127
      %p129 = scmp.ne.s32.totalorder %s117, %s118
      %p130 = scmp.eq.s32.totalorder %s24, 1
      %p131 = por %p129, %p130
      %p133 = scmp.ne.s32.totalorder %s118, %s132
      %p134 = scmp.eq.s32.totalorder %s24, 0
      %p135 = por %p133, %p134
      %s136 = ssub.s32 %s18, %s25
      %p137 = scmp.eq.s32.totalorder %s136, 0
      %s139 = sadd.s32 %s138, 1
      %s140 = scalar_select %p137, %s138, %s139
      %p143 = pneg %p137
      %p144 = scmp.eq.s32.totalorder %s18, 1
      %p145 = por %p143, %p144
      %p146 = scmp.ne.s32.totalorder %s138, %s141
      %p147 = scmp.eq.s32.totalorder %s18, 0
      %p148 = por %p146, %p147
      %p149 = scmp.ne.s32.totalorder %s138, %s141
      %p150 = scmp.eq.s32.totalorder %s23, 1
      %p151 = por %p149, %p150
      %p152 = scmp.ne.s32.totalorder %s141, %s142
      %p153 = scmp.eq.s32.totalorder %s23, 0
      %p154 = por %p152, %p153
      %p155 = scmp.ne.s32.totalorder %s141, %s142
      %p156 = scmp.eq.s32.totalorder %s24, 1
      %p157 = por %p155, %p156
      %p159 = scmp.ne.s32.totalorder %s142, %s158
      %p160 = scmp.eq.s32.totalorder %s24, 0
      %p161 = por %p159, %p160
      %p162 = scmp.le.s32.totalorder 1, %s18
      %p163 = scmp.lt.s32.totalorder %s18, 3
      %p164 = pnand %p162, %p163
      %p165 = pneg %p164
      // Predicated region
      $region9: #{tpu_custom_call.1} parent=5 // pred_check
        _
      $region10: #{tpu_custom_call.1} parent=5 // pred_check_branch
        %167 = sbr.rel (%p164) target = $region12
      $region11: #{tpu_custom_call.1} parent=5 // pred_region
        %s168 = ssub.s32 %s18, 1
        // Predicated region
        $region13: #{tpu_custom_call.1} parent=11 // pred_check
          %p169 = pneg %p65
        $region14: #{tpu_custom_call.1} parent=11 // pred_check_branch
          %171 = sbr.rel (%p169) target = $region16
        $region15: #{tpu_custom_call.1} parent=11 // pred_region
          %s173 = ssub.s32 1024, 1024
          %174 = vsyncadd [#allocation6], %s173
          %s175 = sshll.u32 [#allocation5], 4
          %s176 = int_to_ptr.vmem [resolvable:$true] %s175
          %181 = dma.hbm_to_vmem [thread:$0]  %s1, 1024, %s176, [#allocation6], 64, 64, 4
        $region16: #{tpu_custom_call.1} parent=11 // pred_fallthru
          _
        // Predicated region
        $region17: #{tpu_custom_call.1} parent=11 // pred_check
          %p182 = pneg %p86
        $region18: #{tpu_custom_call.1} parent=11 // pred_check_branch
          %184 = sbr.rel (%p182) target = $region20
        $region19: #{tpu_custom_call.1} parent=11 // pred_region
          _
        $region20: #{tpu_custom_call.1} parent=11 // pred_fallthru
          _
        // Predicated region
        $region21: #{tpu_custom_call.1} parent=11 // pred_check
          %p185 = pneg %p107
        $region22: #{tpu_custom_call.1} parent=11 // pred_check_branch
          %187 = sbr.rel (%p185) target = $region24
        $region23: #{tpu_custom_call.1} parent=11 // pred_region
          %s189 = ssub.s32 1024, 1024
          %190 = vsyncadd [#allocation6], %s189
          %s191 = sshll.u32 [#allocation7], 4
          %s192 = int_to_ptr.vmem [resolvable:$true] %s191
          %197 = dma.hbm_to_vmem [thread:$0]  %s3, 1024, %s192, [#allocation6], 64, 64, 4
        $region24: #{tpu_custom_call.1} parent=11 // pred_fallthru
          _
        // Predicated region
        $region25: #{tpu_custom_call.1} parent=11 // pred_check
          %p198 = pneg %p128
        $region26: #{tpu_custom_call.1} parent=11 // pred_check_branch
          %200 = sbr.rel (%p198) target = $region28
        $region27: #{tpu_custom_call.1} parent=11 // pred_region
          _
        $region28: #{tpu_custom_call.1} parent=11 // pred_fallthru
          _
      $region12: #{tpu_custom_call.1} parent=5 // pred_fallthru
        _
      %p201 = scmp.lt.s32.totalorder %s18, 2
      // Predicated region
      $region29: #{tpu_custom_call.1} parent=5 // pred_check
        %p202 = pneg %p201
      $region30: #{tpu_custom_call.1} parent=5 // pred_check_branch
        %204 = sbr.rel (%p202) target = $region32
      $region31: #{tpu_custom_call.1} parent=5 // pred_region
        // Predicated region
        $region33: #{tpu_custom_call.1} parent=31 // pred_check
          %p205 = pneg %p38
        $region34: #{tpu_custom_call.1} parent=31 // pred_check_branch
          %207 = sbr.rel (%p205) target = $region36
        $region35: #{tpu_custom_call.1} parent=31 // pred_region
          %s208 = sand.u32 %s28, 1
          %s209 = scalar_lea.sflag [#allocation3], %s208
          %s210 = sand.u32 %s28, 1
          %s211 = smul.addr %s210, 64
          %s212 = scalar_lea.vmem [#allocation2], %s211
          %s213 = smul.u32 8, %s18
          %s215 = ssub.s32 1024, 1024
          %216 = vsyncadd %s209, %s215
          %s217 = smul.addr %s213, 128
          %s218 = scalar_lea.hbm %s0, %s217
          %s219 = sshll.u32 %s212, 4
          %s220 = int_to_ptr.vmem [resolvable:$true] %s219
          %225 = dma.hbm_to_vmem [thread:$0]  %s218, 1024, %s220, %s209, 128, 128, 8
        $region36: #{tpu_custom_call.1} parent=31 // pred_fallthru
          _
      $region32: #{tpu_custom_call.1} parent=5 // pred_fallthru
        _
      %p226 = scmp.le.s32.totalorder 1, %s18
      %p227 = scmp.lt.s32.totalorder %s18, 3
      %p228 = pnand %p226, %p227
      %p229 = pneg %p228
      // Predicated region
      $region37: #{tpu_custom_call.1} parent=5 // pred_check
        _
      $region38: #{tpu_custom_call.1} parent=5 // pred_check_branch
        %231 = sbr.rel (%p228) target = $region40
      $region39: #{tpu_custom_call.1} parent=5 // pred_region
        %s232 = ssub.s32 %s18, 1
        %s233 = sand.u32 %s31, 1
        %s234 = scalar_lea.sflag [#allocation3], %s233
        %s235 = sand.u32 %s31, 1
        %s236 = smul.addr %s235, 64
        %s237 = scalar_lea.vmem [#allocation2], %s236
        // Predicated region
        $region41: #{tpu_custom_call.1} parent=39 // pred_check
          %p238 = pneg %p44
        $region42: #{tpu_custom_call.1} parent=39 // pred_check_branch
          %240 = sbr.rel (%p238) target = $region44
        $region43: #{tpu_custom_call.1} parent=39 // pred_region
          %241 = dma.done %s234, 1024
        $region44: #{tpu_custom_call.1} parent=39 // pred_fallthru
          _
        // Predicated region
        $region45: #{tpu_custom_call.1} parent=39 // pred_check
          %p242 = pneg %p65
        $region46: #{tpu_custom_call.1} parent=39 // pred_check_branch
          %244 = sbr.rel (%p242) target = $region48
        $region47: #{tpu_custom_call.1} parent=39 // pred_region
          %245 = dma.done [#allocation6], 1024
        $region48: #{tpu_custom_call.1} parent=39 // pred_fallthru
          _
        // Predicated region
        $region49: #{tpu_custom_call.1} parent=39 // pred_check
          %p246 = pneg %p107
        $region50: #{tpu_custom_call.1} parent=39 // pred_check_branch
          %248 = sbr.rel (%p246) target = $region52
        $region51: #{tpu_custom_call.1} parent=39 // pred_region
          %249 = dma.done [#allocation6], 1024
        $region52: #{tpu_custom_call.1} parent=39 // pred_fallthru
          _
        %s250 = sand.u32 %s31, 1
        %s251 = scalar_lea.sflag [#allocation3], %s250
        %s252 = sand.u32 %s31, 1
        %s253 = smul.addr %s252, 64
        %s254 = scalar_lea.vmem [#allocation2], %s253
        %p255 = pneg %p44
        %p256 = pneg %p41
        %p257 = pneg %p65
        %p258 = pneg %p62
        %p259 = pneg %p86
        %p260 = pneg %p83
        %p261 = pneg %p107
        %p262 = pneg %p104
        %p263 = pneg %p128
        %p264 = pneg %p125
        %p265 = pneg %p154
        %p266 = pneg %p151
        %s267 = sand.u32 %s141, 1
        %s268 = scalar_lea.sflag [#allocation4], %s267
        %s269 = sand.u32 %s141, 1
        %s270 = smul.addr %s269, 64
        %s271 = scalar_lea.vmem [#allocation8], %s270
        %s272 = smul.u32 8, %s23
        %s273 = smul.u32 8, %s23
        %v275 = vld [vmem:[%s237] sm:$0xff]
        %v276 = vld [vmem:[%s237 + $0x8] sm:$0xff]
        %v277 = vld [vmem:[%s237 + $0x10] sm:$0xff]
        %v278 = vld [vmem:[%s237 + $0x18] sm:$0xff]
        %v279 = vld [vmem:[%s237 + $0x20] sm:$0xff]
        %v280 = vld [vmem:[%s237 + $0x28] sm:$0xff]
        %v281 = vld [vmem:[%s237 + $0x30] sm:$0xff]
        %v282 = vld [vmem:[%s237 + $0x38] sm:$0xff]
        %v283 = vpack.c.bf16 %v276, %v275
        %v284 = vpack.c.bf16 %v278, %v277
        %v285 = vpack.c.bf16 %v280, %v279
        %v286 = vpack.c.bf16 %v282, %v281
        %v287 = vld [vmem:[#allocation5] sm:$0xf]
        %v288 = vld [vmem:[#allocation5 + $0x4] sm:$0xf]
        %v289 = vld [vmem:[#allocation5 + $0x8] sm:$0xf]
        %v290 = vld [vmem:[#allocation5 + $0xc] sm:$0xf]
        %v291 = vld [vmem:[#allocation5 + $0x10] sm:$0xf]
        %v292 = vld [vmem:[#allocation5 + $0x14] sm:$0xf]
        %v293 = vld [vmem:[#allocation5 + $0x18] sm:$0xf]
        %v294 = vld [vmem:[#allocation5 + $0x1c] sm:$0xf]
        %v295 = vld [vmem:[#allocation5 + $0x20] sm:$0xf]
        %v296 = vld [vmem:[#allocation5 + $0x24] sm:$0xf]
        %v297 = vld [vmem:[#allocation5 + $0x28] sm:$0xf]
        %v298 = vld [vmem:[#allocation5 + $0x2c] sm:$0xf]
        %v299 = vld [vmem:[#allocation5 + $0x30] sm:$0xf]
        %v300 = vld [vmem:[#allocation5 + $0x34] sm:$0xf]
        %v301 = vld [vmem:[#allocation5 + $0x38] sm:$0xf]
        %v302 = vld [vmem:[#allocation5 + $0x3c] sm:$0xf]
        %v303 = vld [vmem:[%s2] sm:$0x1]
        %v305 = vlaneseq
        %v306 = vshrl.u32 %v305, 7
        %v307 = vsub.s32 0, %v306
        %v308 = vrot.slane %v303, %v307
        %v326 = vunpack.c.l.b16 %v287
        %v327 = vunpack.c.l.b16 %v288
        %v328 = vunpack.c.l.b16 %v289
        %v329 = vunpack.c.l.b16 %v290
        %v330 = vunpack.c.l.b16 %v291
        %v331 = vunpack.c.l.b16 %v292
        %v332 = vunpack.c.l.b16 %v293
        %v333 = vunpack.c.l.b16 %v294
        %v334 = vunpack.c.l.b16 %v295
        %v335 = vunpack.c.l.b16 %v296
        %v336 = vunpack.c.l.b16 %v297
        %v337 = vunpack.c.l.b16 %v298
        %v338 = vunpack.c.l.b16 %v299
        %v339 = vunpack.c.l.b16 %v300
        %v340 = vunpack.c.l.b16 %v301
        %v341 = vunpack.c.l.b16 %v302
        %v342 = vpack.c.b16 %v327, %v326
        %v343 = vpack.c.b16 %v329, %v328
        %v344 = vpack.c.b16 %v331, %v330
        %v345 = vpack.c.b16 %v333, %v332
        %v346 = vpack.c.b16 %v335, %v334
        %v347 = vpack.c.b16 %v337, %v336
        %v348 = vpack.c.b16 %v339, %v338
        %v349 = vpack.c.b16 %v341, %v340
        %358 = vmatprep.subr.bf16.mxu0 0
        %359 = vmatpush1.bf16.msra.mxu0 %v349
        %360 = vmatprep.subr.bf16.mxu0 0
        %361 = vmatpush1.bf16.msra.mxu0 %v348
        %362 = vmatprep.subr.bf16.mxu0 0
        %363 = vmatpush1.bf16.msra.mxu0 %v347
        %364 = vmatprep.subr.bf16.mxu0 0
        %365 = vmatpush1.bf16.msra.mxu0 %v346
        %366 = vmatprep.subr.bf16.mxu0 0
        %367 = vmatpush1.bf16.msra.mxu0 %v345
        %368 = vmatprep.subr.bf16.mxu0 0
        %369 = vmatpush1.bf16.msra.mxu0 %v344
        %370 = vmatprep.subr.bf16.mxu0 0
        %371 = vmatpush1.bf16.msra.mxu0 %v343
        %372 = vmatprep.subr.bf16.mxu0 0
        %373 = vmatpush1.bf16.msra.mxu0 %v342
        %374 = vmatprep.subr.bf16.mxu0 0
        %375 = vmatpush2.bf16.msra.mxu0 0
        %376 = vmatprep.subr.bf16.mxu0 0
        %377 = vmatpush2.bf16.msra.mxu0 0
        %378 = vmatprep.subr.bf16.mxu0 0
        %379 = vmatpush2.bf16.msra.mxu0 0
        %380 = vmatprep.subr.bf16.mxu0 0
        %381 = vmatpush2.bf16.msra.mxu0 0
        %382 = vmatprep.subr.bf16.mxu0 0
        %383 = vmatpush2.bf16.msra.mxu0 0
        %384 = vmatprep.subr.bf16.mxu0 0
        %385 = vmatpush2.bf16.msra.mxu0 0
        %386 = vmatprep.subr.bf16.mxu0 0
        %387 = vmatpush2.bf16.msra.mxu0 0
        %388 = vmatprep.subr.bf16.mxu0 0
        %389 = vmatpush2.bf16.msra.mxu0 0
        %390 = vmatprep.mubr.bf16.mxu0 0
        %391 = vmatmul.mubr.bf16.gmra.mxu0 %v283
        %v392 = vpop.f32.mrf.mxu0
        %v393 = vadd.f32 %v308, %v392
        %v394 = vpop.f32.mrf.mxu0
        %v395 = vpop.f32.mrf.mxu0
        %v396 = vadd.f32 %v308, %v395
        %v397 = vpop.f32.mrf.mxu0
        %398 = vmatprep.mubr.bf16.mxu0 0
        %399 = vmatmul.mubr.bf16.gmra.mxu0 %v284
        %v400 = vpop.f32.mrf.mxu0
        %v401 = vadd.f32 %v308, %v400
        %v402 = vpop.f32.mrf.mxu0
        %v403 = vpop.f32.mrf.mxu0
        %v404 = vadd.f32 %v308, %v403
        %v405 = vpop.f32.mrf.mxu0
        %406 = vmatprep.mubr.bf16.mxu0 0
        %407 = vmatmul.mubr.bf16.gmra.mxu0 %v285
        %v408 = vpop.f32.mrf.mxu0
        %v409 = vadd.f32 %v308, %v408
        %v410 = vpop.f32.mrf.mxu0
        %v411 = vpop.f32.mrf.mxu0
        %v412 = vadd.f32 %v308, %v411
        %v413 = vpop.f32.mrf.mxu0
        %414 = vmatprep.mubr.bf16.mxu0 0
        %415 = vmatmul.mubr.bf16.gmra.mxu0 %v286
        %v416 = vpop.f32.mrf.mxu0
        %v417 = vadd.f32 %v308, %v416
        %v418 = vpop.f32.mrf.mxu0
        %v419 = vpop.f32.mrf.mxu0
        %v420 = vadd.f32 %v308, %v419
        %v421 = vpop.f32.mrf.mxu0
        %422 = vdwg.mxu0
        %v423 = vmul.f32 %v393, 0.5
        %v424 = vmul.f32 %v396, 0.5
        %v425 = vmul.f32 %v401, 0.5
        %v426 = vmul.f32 %v404, 0.5
        %v427 = vmul.f32 %v409, 0.5
        %v428 = vmul.f32 %v412, 0.5
        %v429 = vmul.f32 %v417, 0.5
        %v430 = vmul.f32 %v420, 0.5
        %v431 = vmul.f32 %v393, 0.044715
        %v432 = vmul.f32 %v396, 0.044715
        %v433 = vmul.f32 %v401, 0.044715
        %v434 = vmul.f32 %v404, 0.044715
        %v435 = vmul.f32 %v409, 0.044715
        %v436 = vmul.f32 %v412, 0.044715
        %v437 = vmul.f32 %v417, 0.044715
        %v438 = vmul.f32 %v420, 0.044715
        %v439 = vmul.f32 %v431, %v393
        %v440 = vmul.f32 %v432, %v396
        %v441 = vmul.f32 %v433, %v401
        %v442 = vmul.f32 %v434, %v404
        %v443 = vmul.f32 %v435, %v409
        %v444 = vmul.f32 %v436, %v412
        %v445 = vmul.f32 %v437, %v417
        %v446 = vmul.f32 %v438, %v420
        %v447 = vmul.f32 %v439, %v393
        %v448 = vmul.f32 %v440, %v396
        %v449 = vmul.f32 %v441, %v401
        %v450 = vmul.f32 %v442, %v404
        %v451 = vmul.f32 %v443, %v409
        %v452 = vmul.f32 %v444, %v412
        %v453 = vmul.f32 %v445, %v417
        %v454 = vmul.f32 %v446, %v420
        %v455 = vadd.f32 %v393, %v447
        %v456 = vadd.f32 %v396, %v448
        %v457 = vadd.f32 %v401, %v449
        %v458 = vadd.f32 %v404, %v450
        %v459 = vadd.f32 %v409, %v451
        %v460 = vadd.f32 %v412, %v452
        %v461 = vadd.f32 %v417, %v453
        %v462 = vadd.f32 %v420, %v454
        %v463 = vmul.f32 %v455, 0.7978846
        %v464 = vmul.f32 %v456, 0.7978846
        %v465 = vmul.f32 %v457, 0.7978846
        %v466 = vmul.f32 %v458, 0.7978846
        %v467 = vmul.f32 %v459, 0.7978846
        %v468 = vmul.f32 %v460, 0.7978846
        %v469 = vmul.f32 %v461, 0.7978846
        %v470 = vmul.f32 %v462, 0.7978846
        %v471 = vtanh.pop %v463
        %v472 = vtanh.pop %v464
        %v473 = vtanh.pop %v465
        %v474 = vtanh.pop %v466
        %v475 = vtanh.pop %v467
        %v476 = vtanh.pop %v468
        %v477 = vtanh.pop %v469
        %v478 = vtanh.pop %v470
        %v479 = vadd.f32 %v471, 1.0
        %v480 = vadd.f32 %v472, 1.0
        %v481 = vadd.f32 %v473, 1.0
        %v482 = vadd.f32 %v474, 1.0
        %v483 = vadd.f32 %v475, 1.0
        %v484 = vadd.f32 %v476, 1.0
        %v485 = vadd.f32 %v477, 1.0
        %v486 = vadd.f32 %v478, 1.0
        %v487 = vmul.f32 %v423, %v479
        %v488 = vmul.f32 %v424, %v480
        %v489 = vmul.f32 %v425, %v481
        %v490 = vmul.f32 %v426, %v482
        %v491 = vmul.f32 %v427, %v483
        %v492 = vmul.f32 %v428, %v484
        %v493 = vmul.f32 %v429, %v485
        %v494 = vmul.f32 %v430, %v486
        %v495 = vpack.c.bf16 %v488, %v487
        %v496 = vpack.c.bf16 %v490, %v489
        %v497 = vpack.c.bf16 %v492, %v491
        %v498 = vpack.c.bf16 %v494, %v493
        %v499 = vld [vmem:[#allocation7] sm:$0xf]
        %v500 = vld [vmem:[#allocation7 + $0x4] sm:$0xf]
        %v501 = vld [vmem:[#allocation7 + $0x8] sm:$0xf]
        %v502 = vld [vmem:[#allocation7 + $0xc] sm:$0xf]
        %v503 = vld [vmem:[#allocation7 + $0x10] sm:$0xf]
        %v504 = vld [vmem:[#allocation7 + $0x14] sm:$0xf]
        %v505 = vld [vmem:[#allocation7 + $0x18] sm:$0xf]
        %v506 = vld [vmem:[#allocation7 + $0x1c] sm:$0xf]
        %v507 = vld [vmem:[#allocation7 + $0x20] sm:$0xf]
        %v508 = vld [vmem:[#allocation7 + $0x24] sm:$0xf]
        %v509 = vld [vmem:[#allocation7 + $0x28] sm:$0xf]
        %v510 = vld [vmem:[#allocation7 + $0x2c] sm:$0xf]
        %v511 = vld [vmem:[#allocation7 + $0x30] sm:$0xf]
        %v512 = vld [vmem:[#allocation7 + $0x34] sm:$0xf]
        %v513 = vld [vmem:[#allocation7 + $0x38] sm:$0xf]
        %v514 = vld [vmem:[#allocation7 + $0x3c] sm:$0xf]
        %v515 = vld [vmem:[%s4] sm:$0x1]
        %v517 = vlaneseq
        %v518 = vshrl.u32 %v517, 7
        %v519 = vsub.s32 0, %v518
        %v520 = vrot.slane %v515, %v519
        %v538 = vunpack.c.l.b16 %v499
        %v539 = vunpack.c.l.b16 %v500
        %v540 = vunpack.c.l.b16 %v501
        %v541 = vunpack.c.l.b16 %v502
        %v542 = vunpack.c.l.b16 %v503
        %v543 = vunpack.c.l.b16 %v504
        %v544 = vunpack.c.l.b16 %v505
        %v545 = vunpack.c.l.b16 %v506
        %v546 = vunpack.c.l.b16 %v507
        %v547 = vunpack.c.l.b16 %v508
        %v548 = vunpack.c.l.b16 %v509
        %v549 = vunpack.c.l.b16 %v510
        %v550 = vunpack.c.l.b16 %v511
        %v551 = vunpack.c.l.b16 %v512
        %v552 = vunpack.c.l.b16 %v513
        %v553 = vunpack.c.l.b16 %v514
        %v554 = vpack.c.b16 %v539, %v538
        %v555 = vpack.c.b16 %v541, %v540
        %v556 = vpack.c.b16 %v543, %v542
        %v557 = vpack.c.b16 %v545, %v544
        %v558 = vpack.c.b16 %v547, %v546
        %v559 = vpack.c.b16 %v549, %v548
        %v560 = vpack.c.b16 %v551, %v550
        %v561 = vpack.c.b16 %v553, %v552
        %570 = vmatprep.subr.bf16.mxu0 0
        %571 = vmatpush1.bf16.msra.mxu0 %v561
        %572 = vmatprep.subr.bf16.mxu0 0
        %573 = vmatpush1.bf16.msra.mxu0 %v560
        %574 = vmatprep.subr.bf16.mxu0 0
        %575 = vmatpush1.bf16.msra.mxu0 %v559
        %576 = vmatprep.subr.bf16.mxu0 0
        %577 = vmatpush1.bf16.msra.mxu0 %v558
        %578 = vmatprep.subr.bf16.mxu0 0
        %579 = vmatpush1.bf16.msra.mxu0 %v557
        %580 = vmatprep.subr.bf16.mxu0 0
        %581 = vmatpush1.bf16.msra.mxu0 %v556
        %582 = vmatprep.subr.bf16.mxu0 0
        %583 = vmatpush1.bf16.msra.mxu0 %v555
        %584 = vmatprep.subr.bf16.mxu0 0
        %585 = vmatpush1.bf16.msra.mxu0 %v554
        %586 = vmatprep.subr.bf16.mxu0 0
        %587 = vmatpush2.bf16.msra.mxu0 0
        %588 = vmatprep.subr.bf16.mxu0 0
        %589 = vmatpush2.bf16.msra.mxu0 0
        %590 = vmatprep.subr.bf16.mxu0 0
        %591 = vmatpush2.bf16.msra.mxu0 0
        %592 = vmatprep.subr.bf16.mxu0 0
        %593 = vmatpush2.bf16.msra.mxu0 0
        %594 = vmatprep.subr.bf16.mxu0 0
        %595 = vmatpush2.bf16.msra.mxu0 0
        %596 = vmatprep.subr.bf16.mxu0 0
        %597 = vmatpush2.bf16.msra.mxu0 0
        %598 = vmatprep.subr.bf16.mxu0 0
        %599 = vmatpush2.bf16.msra.mxu0 0
        %600 = vmatprep.subr.bf16.mxu0 0
        %601 = vmatpush2.bf16.msra.mxu0 0
        %602 = vmatprep.mubr.bf16.mxu0 0
        %603 = vmatmul.mubr.bf16.gmra.mxu0 %v495
        %v604 = vpop.f32.mrf.mxu0
        %v605 = vadd.f32 %v520, %v604
        %v606 = vpop.f32.mrf.mxu0
        %v607 = vpop.f32.mrf.mxu0
        %v608 = vadd.f32 %v520, %v607
        %v609 = vpop.f32.mrf.mxu0
        %610 = vmatprep.mubr.bf16.mxu0 0
        %611 = vmatmul.mubr.bf16.gmra.mxu0 %v496
        %v612 = vpop.f32.mrf.mxu0
        %v613 = vadd.f32 %v520, %v612
        %v614 = vpop.f32.mrf.mxu0
        %v615 = vpop.f32.mrf.mxu0
        %v616 = vadd.f32 %v520, %v615
        %v617 = vpop.f32.mrf.mxu0
        %618 = vmatprep.mubr.bf16.mxu0 0
        %619 = vmatmul.mubr.bf16.gmra.mxu0 %v497
        %v620 = vpop.f32.mrf.mxu0
        %v621 = vadd.f32 %v520, %v620
        %v622 = vpop.f32.mrf.mxu0
        %v623 = vpop.f32.mrf.mxu0
        %v624 = vadd.f32 %v520, %v623
        %v625 = vpop.f32.mrf.mxu0
        %626 = vmatprep.mubr.bf16.mxu0 0
        %627 = vmatmul.mubr.bf16.gmra.mxu0 %v498
        %v628 = vpop.f32.mrf.mxu0
        %v629 = vadd.f32 %v520, %v628
        %v630 = vpop.f32.mrf.mxu0
        %v631 = vpop.f32.mrf.mxu0
        %v632 = vadd.f32 %v520, %v631
        %v633 = vpop.f32.mrf.mxu0
        %634 = vdwg.mxu0
        %635 = vst [vmem:[%s271] sm:$0xff] %v605
        %636 = vst [vmem:[%s271 + $0x8] sm:$0xff] %v608
        %637 = vst [vmem:[%s271 + $0x10] sm:$0xff] %v613
        %638 = vst [vmem:[%s271 + $0x18] sm:$0xff] %v616
        %639 = vst [vmem:[%s271 + $0x20] sm:$0xff] %v621
        %640 = vst [vmem:[%s271 + $0x28] sm:$0xff] %v624
        %641 = vst [vmem:[%s271 + $0x30] sm:$0xff] %v629
        %642 = vst [vmem:[%s271 + $0x38] sm:$0xff] %v632
        %s643 = sand.u32 %s141, 1
        %s644 = scalar_lea.sflag [#allocation4], %s643
        %s645 = sand.u32 %s141, 1
        %s646 = smul.addr %s645, 64
        %s647 = scalar_lea.vmem [#allocation8], %s646
        // Predicated region
        $region53: #{tpu_custom_call.1} parent=39 // pred_check
          %p648 = pneg %p151
        $region54: #{tpu_custom_call.1} parent=39 // pred_check_branch
          %650 = sbr.rel (%p648) target = $region56
        $region55: #{tpu_custom_call.1} parent=39 // pred_region
          %s651 = smul.u32 8, %s23
          %s653 = ssub.s32 1024, 1024
          %654 = vsyncadd %s644, %s653
          %s655 = smul.addr %s651, 128
          %s656 = scalar_lea.hbm %s5, %s655
          %s657 = sshll.u32 %s647, 4
          %s658 = int_to_ptr.vmem [resolvable:$true] %s657
          %663 = dma.vmem_to_hbm [thread:$0]  %s658, 1024, %s656, %s644, 128, 128, 8
        $region56: #{tpu_custom_call.1} parent=39 // pred_fallthru
          _
      $region40: #{tpu_custom_call.1} parent=5 // pred_fallthru
        _
      %p664 = scmp.le.s32.totalorder 2, %s18
      // Predicated region
      $region57: #{tpu_custom_call.1} parent=5 // pred_check
        %p665 = pneg %p664
      $region58: #{tpu_custom_call.1} parent=5 // pred_check_branch
        %667 = sbr.rel (%p665) target = $region60
      $region59: #{tpu_custom_call.1} parent=5 // pred_region
        %s668 = ssub.s32 %s18, 2
        // Predicated region
        $region61: #{tpu_custom_call.1} parent=59 // pred_check
          %p669 = pneg %p157
        $region62: #{tpu_custom_call.1} parent=59 // pred_check_branch
          %671 = sbr.rel (%p669) target = $region64
        $region63: #{tpu_custom_call.1} parent=59 // pred_region
          %s672 = sand.u32 %s142, 1
          %s673 = scalar_lea.sflag [#allocation4], %s672
          %s674 = sand.u32 %s142, 1
          %s675 = smul.addr %s674, 64
          %s676 = scalar_lea.vmem [#allocation8], %s675
          %677 = dma.done %s673, 1024
        $region64: #{tpu_custom_call.1} parent=59 // pred_fallthru
          _
      $region60: #{tpu_custom_call.1} parent=5 // pred_fallthru
        _
    $region6: #{tpu_custom_call.1} parent=1 // loop_footer
      %s22 = sadd.s32 1, %s18
    $region7: #{tpu_custom_call.1} parent=1 // loop_footer_branch
      %17 = sbr.rel target = $region3
    $region8: #{tpu_custom_call.1} parent=1 // loop_exit
      _
    %678 = vsyncpa [#allocation3], 1
    %s679 = scalar_lea.sflag [#allocation3], 1
    %680 = vsyncpa %s679, 1
    %681 = vsyncpa [#allocation6], 1
    %682 = vsyncpa [#allocation4], 1
    %s683 = scalar_lea.sflag [#allocation4], 1
    %684 = vsyncpa %s683, 1

</llo_original>
